<compile_context>
chip_gen: v7x
topology: tpu7x:2x2x1
jax: 0.10.0
libtpu: 0.0.40
codegen_flags: <defaults>
</compile_context>

<pallas_src>
import functools

import jax
import jax.numpy as jnp
from jax.experimental import pallas as pl
from jax.experimental.pallas import tpu as pltpu

_LANE = 128
_SUBLANE = 8


def _cdiv(a, b):
    return -(-a // b)


def _round_up(n, m):
    return _cdiv(n, m) * m


def _round_down(n, m):
    return (n // m) * m


# -----------------------------------------------------------------------------
# Kernels
# -----------------------------------------------------------------------------
def _fused_kernel(x_ref, y_ref, wx_ref, wy_ref):
    """Single pass: per-row cosine weight + apply.  Block = (row tile, full HW)."""
    x = x_ref[...]
    y = y_ref[...]
    xf = x.astype(jnp.float32)
    yf = y.astype(jnp.float32)

    # Per-row reductions over the lane (HW) axis.  The minor dim may be
    # lane-padded (HW % 128 != 0); Mosaic masks reductions over the implicit
    # padding of full-extent blocks, so no HBM padding / explicit mask needed.
    dot = jnp.sum(xf * yf, axis=-1, keepdims=True)            # (TR, 1)
    nx = jnp.sqrt(jnp.sum(xf * xf, axis=-1, keepdims=True))   # (TR, 1)
    ny = jnp.sqrt(jnp.sum(yf * yf, axis=-1, keepdims=True))   # (TR, 1)

    cos = dot / jnp.maximum(nx * ny, jnp.float32(1e-8))       # F.cosine_similarity eps
    w = jnp.maximum(cos, jnp.float32(0.0))                    # relu

    # w*x + x == (w+1)*x ; (1-w)*y + y == (2-w)*y  (one VPU mul per element).
    if x.dtype == jnp.float32:
        wx_ref[...] = (w + 1.0) * xf
        wy_ref[...] = (2.0 - w) * yf
    else:
        # bf16/fp16 apply path: keep the reductions in f32 but multiply in the
        # native dtype (bf16 VALU on v6e/v7x) -> no full-tile f32 store temps.
        wx_ref[...] = (w + 1.0).astype(x.dtype) * x
        wy_ref[...] = (2.0 - w).astype(y.dtype) * y


def _reduce_kernel(x_ref, y_ref, w_ref, dot_sc, nx2_sc, ny2_sc, *, hw, thw):
    """Two-pass fallback, pass 1: accumulate per-row dot / ||x||^2 / ||y||^2 over
    HW chunks, emit w = relu(cos) at the last chunk."""
    j = pl.program_id(1)

    @pl.when(j == 0)
    def _():
        dot_sc[...] = jnp.zeros_like(dot_sc)
        nx2_sc[...] = jnp.zeros_like(nx2_sc)
        ny2_sc[...] = jnp.zeros_like(ny2_sc)

    xf = x_ref[...].astype(jnp.float32)
    yf = y_ref[...].astype(jnp.float32)
    if hw % thw != 0:
        # Last HW chunk is partial: mask out-of-range lanes before reducing.
        lane = jax.lax.broadcasted_iota(jnp.int32, xf.shape, 1)
        valid = (j * thw + lane) < hw
        xf = jnp.where(valid, xf, 0.0)
        yf = jnp.where(valid, yf, 0.0)

    dot_sc[...] += jnp.sum(xf * yf, axis=-1, keepdims=True)
    nx2_sc[...] += jnp.sum(xf * xf, axis=-1, keepdims=True)
    ny2_sc[...] += jnp.sum(yf * yf, axis=-1, keepdims=True)

    @pl.when(j == pl.num_programs(1) - 1)
    def _():
        denom = jnp.maximum(jnp.sqrt(nx2_sc[...]) * jnp.sqrt(ny2_sc[...]),
                            jnp.float32(1e-8))
        w_ref[...] = jnp.maximum(dot_sc[...] / denom, jnp.float32(0.0))


def _apply_kernel(w_ref, x_ref, y_ref, wx_ref, wy_ref):
    """Two-pass fallback, pass 2: broadcast-apply w over HW chunks."""
    w = w_ref[...]                                  # (TR, 1) float32
    x = x_ref[...]
    y = y_ref[...]
    if x.dtype == jnp.float32:
        wx_ref[...] = (w + 1.0) * x
        wy_ref[...] = (2.0 - w) * y
    else:
        wx_ref[...] = (w + 1.0).astype(x.dtype) * x
        wy_ref[...] = (2.0 - w).astype(y.dtype) * y


# -----------------------------------------------------------------------------
# Plain-JAX reference / tiny-problem fallback
# -----------------------------------------------------------------------------
def _cosine_fuse_ref(fx, fy, eps=1e-8):
    b, c, _, _ = fx.shape
    x = fx.reshape(b, c, -1).astype(jnp.float32)
    y = fy.reshape(b, c, -1).astype(jnp.float32)
    dot = jnp.sum(x * y, axis=2)
    nx = jnp.sqrt(jnp.sum(x * x, axis=2))
    ny = jnp.sqrt(jnp.sum(y * y, axis=2))
    w = jnp.maximum(dot / jnp.maximum(nx * ny, eps), 0.0)[:, :, None, None]
    wx = (w + 1.0) * fx.astype(jnp.float32)
    wy = (2.0 - w) * fy.astype(jnp.float32)
    return wx.astype(fx.dtype), wy.astype(fy.dtype)


# -----------------------------------------------------------------------------
# Wrapper
# -----------------------------------------------------------------------------
@functools.partial(
    jax.jit,
    static_argnames=("vmem_budget_bytes", "min_pallas_bytes", "donate_inputs"),
)
def csfnet_forward(
    rgb,
    thermal,
    *,
    vmem_budget_bytes=32 * 1024 * 1024,   # pipelined buffers + in-kernel temps
    min_pallas_bytes=1 << 20,             # below this, XLA fusion wins
    donate_inputs=False,
):
    """CSFNet forward.  rgb, thermal: (B, C, H, W).  Returns (w_x, w_y)."""
    assert rgb.shape == thermal.shape and rgb.dtype == thermal.dtype
    assert rgb.ndim == 4
    B, C, H, W = rgb.shape
    R, HW = B * C, H * W
    itemsize = jnp.dtype(rgb.dtype).itemsize

    # Tiny problems: kernel launch / DMA prologue dominates -> plain JAX.
    if 4 * R * HW * itemsize < min_pallas_bytes:
        return _cosine_fuse_ref(rgb, thermal)

    # Free (bitcast) reshape: no pad / copy passes over HBM.
    x = rgb.reshape(R, HW)
    y = thermal.reshape(R, HW)

    HWp = _round_up(HW, _LANE)                 # physical lane extent of one row
    fused_bpe = 8 * itemsize + 8               # 2 in + 2 out, x2 bufs, + f32 temps
    use_fused = min(R, _SUBLANE) * HWp * fused_bpe <= vmem_budget_bytes

    io_alias = {0: 0, 1: 1} if donate_inputs else {}

    if use_fused:
        # ------------- single-pass kernel: (row tile) x (full HW) -------------
        if R <= _SUBLANE:
            TR = R                                             # full-extent block
        else:
            TR = _round_down(vmem_budget_bytes // (HWp * fused_bpe), _SUBLANE)
            if R >= 4 * _SUBLANE:
                # >= 4 grid steps (>= 2 pipelined steps per TC on 2-TC v7x).
                TR = min(TR, max(_SUBLANE, _round_down(_cdiv(R, 4), _SUBLANE)))
            if TR >= R:
                TR = R                                         # whole row axis, 1 block
        grid_r = _cdiv(R, TR)

        row_spec = pl.BlockSpec((TR, HW), lambda i: (i, 0))
        est = _round_up(TR, _SUBLANE) * HWp * fused_bpe
        vmem_limit = max(16 << 20, est + est // 4 + (2 << 20))

        wx, wy = pl.pallas_call(
            _fused_kernel,
            out_shape=(
                jax.ShapeDtypeStruct((R, HW), rgb.dtype),
                jax.ShapeDtypeStruct((R, HW), thermal.dtype),
            ),
            grid=(grid_r,),
            in_specs=[row_spec, row_spec],
            out_specs=(row_spec, row_spec),
            input_output_aliases=io_alias,
            compiler_params=pltpu.CompilerParams(
                dimension_semantics=("parallel",),
                vmem_limit_bytes=vmem_limit,
            ),
        )(x, y)
    else:
        # ------------- two-pass fallback for very large H*W -------------------
        TR = min(R, _SUBLANE)
        red_bpe = 4 * itemsize + 8             # 2 inputs double-buffered + temps
        app_bpe = 8 * itemsize + 8             # 2 in + 2 out double-buffered + temps

        def pick_thw(bpe):
            t = _round_down(vmem_budget_bytes // (TR * bpe), _LANE)
            t = max(t, _LANE)
            return HW if t >= HW else t        # full extent if it fits

        thw_red = pick_thw(red_bpe)
        thw_app = pick_thw(app_bpe)
        grid_r = _cdiv(R, TR)

        est = TR * max(thw_red * red_bpe, thw_app * app_bpe)
        vmem_limit = max(16 << 20, est + est // 4 + (2 << 20))

        def cparams(sem):
            return pltpu.CompilerParams(dimension_semantics=sem,
                                        vmem_limit_bytes=vmem_limit)

        # Pass 1: per-row cosine weight w = relu(cos), shape (R, 1) float32.
        w = pl.pallas_call(
            functools.partial(_reduce_kernel, hw=HW, thw=thw_red),
            out_shape=jax.ShapeDtypeStruct((R, 1), jnp.float32),
            grid=(grid_r, _cdiv(HW, thw_red)),
            in_specs=[
                pl.BlockSpec((TR, thw_red), lambda i, j: (i, j)),
                pl.BlockSpec((TR, thw_red), lambda i, j: (i, j)),
            ],
            out_specs=pl.BlockSpec((TR, 1), lambda i, j: (i, 0)),
            scratch_shapes=[pltpu.VMEM((TR, 1), jnp.float32)] * 3,
            compiler_params=cparams(("parallel", "arbitrary")),
        )(x, y)

        # Pass 2: apply (w+1)*x and (2-w)*y over HW chunks.
        xy_spec = pl.BlockSpec((TR, thw_app), lambda i, j: (i, j))
        wx, wy = pl.pallas_call(
            _apply_kernel,
            out_shape=(
                jax.ShapeDtypeStruct((R, HW), rgb.dtype),
                jax.ShapeDtypeStruct((R, HW), thermal.dtype),
            ),
            grid=(grid_r, _cdiv(HW, thw_app)),
            in_specs=[
                pl.BlockSpec((TR, 1), lambda i, j: (i, 0)),
                xy_spec,
                xy_spec,
            ],
            out_specs=(xy_spec, xy_spec),
            input_output_aliases={1: 0, 2: 1} if donate_inputs else {},
            compiler_params=cparams(("parallel", "parallel")),
        )(w, x, y)

    return wx.reshape(B, C, H, W), wy.reshape(B, C, H, W)


# -----------------------------------------------------------------------------
# Smoke tests
# -----------------------------------------------------------------------------
if __name__ == "__main__":
    key = jax.random.PRNGKey(0)

    cases = [
        # (shape, dtype, extra kwargs)              -- what it exercises
        ((2, 4, 16, 16), jnp.float32, {}),                                   # aligned, single block
        ((4, 9, 9, 10), jnp.float32, {}),                                    # unaligned HW + partial row blocks
        ((2, 4, 16, 16), jnp.bfloat16, {}),                                  # bf16 apply path
        ((2, 4, 16, 16), jnp.float32, dict(vmem_budget_bytes=64 * 1024)),    # two-pass fallback
        ((2, 4, 9, 21), jnp.float32, dict(vmem_budget_bytes=32 * 1024)),     # two-pass + lane mask
    ]

    for shape, dtype, kwargs in cases:
        key, k1, k2 = jax.random.split(key, 3)
        a = jax.random.normal(k1, shape, dtype=jnp.float32).astype(dtype)
        b = jax.random.normal(k2, shape, dtype=jnp.float32).astype(dtype)

        # min_pallas_bytes=0 forces the Pallas path even at smoke-test sizes.
        wx, wy = csfnet_forward(a, b, min_pallas_bytes=0, **kwargs)
        jax.block_until_ready((wx, wy))

        rx, ry = _cosine_fuse_ref(a, b)
        tol = 1e-5 if dtype == jnp.float32 else 2e-2
        assert wx.shape == shape and wy.shape == shape
        assert wx.dtype == dtype and wy.dtype == dtype
        assert jnp.allclose(wx.astype(jnp.float32), rx.astype(jnp.float32),
                            atol=tol, rtol=tol), f"w_x mismatch for {shape} {dtype}"
        assert jnp.allclose(wy.astype(jnp.float32), ry.astype(jnp.float32),
                            atol=tol, rtol=tol), f"w_y mismatch for {shape} {dtype}"

    print("KERNEL_OK")
</pallas_src>

<mosaic_0001>
module attributes {stable_mosaic.version = 11 : i64} {
  func.func @_fused_kernel(%arg0: i32, %arg1: memref<8x256xf32, #tpu.memory_space<vmem>>, %arg2: memref<8x256xf32, #tpu.memory_space<vmem>>, %arg3: memref<8x256xf32, #tpu.memory_space<vmem>>, %arg4: memref<8x256xf32, #tpu.memory_space<vmem>>) attributes {dimension_semantics = [#tpu.dimension_semantics<parallel>], iteration_bounds = array<i64: 1>, scalar_prefetch = 0 : i64, scratch_operands = 0 : i64, tpu.core_type = #tpu.core_type<tc>, window_params = [{transform_indices = @transform_0, window_bounds = array<i64: 8, 256>}, {transform_indices = @transform_1, window_bounds = array<i64: 8, 256>}, {transform_indices = @transform_2, window_bounds = array<i64: 8, 256>}, {transform_indices = @transform_3, window_bounds = array<i64: 8, 256>}]} {
    %c0 = arith.constant 0 : index
    %c0_0 = arith.constant 0 : index
    %0 = vector.load %arg1[%c0, %c0_0] : memref<8x256xf32, #tpu.memory_space<vmem>>, vector<8x256xf32>
    %c0_1 = arith.constant 0 : index
    %c0_2 = arith.constant 0 : index
    %1 = vector.load %arg2[%c0_1, %c0_2] : memref<8x256xf32, #tpu.memory_space<vmem>>, vector<8x256xf32>
    %2 = arith.mulf %0, %1 : vector<8x256xf32>
    %cst = arith.constant dense<0.000000e+00> : vector<8xf32>
    %3 = vector.multi_reduction <add>, %2, %cst [1] : vector<8x256xf32> to vector<8xf32>
    %4 = vector.shape_cast %3 : vector<8xf32> to vector<8x1xf32>
    %5 = arith.mulf %0, %0 : vector<8x256xf32>
    %cst_3 = arith.constant dense<0.000000e+00> : vector<8xf32>
    %6 = vector.multi_reduction <add>, %5, %cst_3 [1] : vector<8x256xf32> to vector<8xf32>
    %7 = vector.shape_cast %6 : vector<8xf32> to vector<8x1xf32>
    %8 = math.sqrt %7 : vector<8x1xf32>
    %9 = arith.mulf %1, %1 : vector<8x256xf32>
    %cst_4 = arith.constant dense<0.000000e+00> : vector<8xf32>
    %10 = vector.multi_reduction <add>, %9, %cst_4 [1] : vector<8x256xf32> to vector<8xf32>
    %11 = vector.shape_cast %10 : vector<8xf32> to vector<8x1xf32>
    %12 = math.sqrt %11 : vector<8x1xf32>
    %13 = arith.mulf %8, %12 : vector<8x1xf32>
    %cst_5 = arith.constant 9.99999993E-9 : f32
    %14 = vector.broadcast %cst_5 : f32 to vector<8x1xf32>
    %15 = arith.maximumf %13, %14 : vector<8x1xf32>
    %16 = arith.divf %4, %15 : vector<8x1xf32>
    %cst_6 = arith.constant 0.000000e+00 : f32
    %17 = vector.broadcast %cst_6 : f32 to vector<8x1xf32>
    %18 = arith.maximumf %16, %17 : vector<8x1xf32>
    %cst_7 = arith.constant 1.000000e+00 : f32
    %19 = vector.broadcast %cst_7 : f32 to vector<8x1xf32>
    %20 = arith.addf %18, %19 : vector<8x1xf32>
    %21 = vector.broadcast %20 : vector<8x1xf32> to vector<8x256xf32>
    %22 = arith.mulf %21, %0 : vector<8x256xf32>
    %c0_8 = arith.constant 0 : index
    %c0_9 = arith.constant 0 : index
    %23 = vector.load %arg3[%c0_8, %c0_9] : memref<8x256xf32, #tpu.memory_space<vmem>>, vector<8x256xf32>
    tpu.vector_store %arg3[%c0_8, %c0_9], %22 {strides = array<i32>} : memref<8x256xf32, #tpu.memory_space<vmem>>, vector<8x256xf32>,
    %cst_10 = arith.constant 2.000000e+00 : f32
    %24 = vector.broadcast %cst_10 : f32 to vector<8x1xf32>
    %25 = arith.subf %24, %18 : vector<8x1xf32>
    %26 = vector.broadcast %25 : vector<8x1xf32> to vector<8x256xf32>
    %27 = arith.mulf %26, %1 : vector<8x256xf32>
    %c0_11 = arith.constant 0 : index
    %c0_12 = arith.constant 0 : index
    %28 = vector.load %arg4[%c0_11, %c0_12] : memref<8x256xf32, #tpu.memory_space<vmem>>, vector<8x256xf32>
    tpu.vector_store %arg4[%c0_11, %c0_12], %27 {strides = array<i32>} : memref<8x256xf32, #tpu.memory_space<vmem>>, vector<8x256xf32>,
    return
  }
  func.func @transform_0(%arg0: i32) -> (i32, i32) {
    %c0_i32 = arith.constant 0 : i32
    %c0_i32_0 = arith.constant 0 : i32
    return %arg0, %c0_i32 : i32, i32
  }
  func.func @transform_1(%arg0: i32) -> (i32, i32) {
    %c0_i32 = arith.constant 0 : i32
    %c0_i32_0 = arith.constant 0 : i32
    return %arg0, %c0_i32 : i32, i32
  }
  func.func @transform_2(%arg0: i32) -> (i32, i32) {
    %c0_i32 = arith.constant 0 : i32
    %c0_i32_0 = arith.constant 0 : i32
    return %arg0, %c0_i32 : i32, i32
  }
  func.func @transform_3(%arg0: i32) -> (i32, i32) {
    %c0_i32 = arith.constant 0 : i32
    %c0_i32_0 = arith.constant 0 : i32
    return %arg0, %c0_i32 : i32, i32
  }
}

</mosaic_0001>

<llo_original>
// kernel: csfnet_forward.1
$region0: #{csfnet_forward.1}
  #allocation0 [shape = 'u32[]', space=smem, size = 0x4, offset = 0x4, fixed_abs, tag = 'smem constant byte address 0x4 - core index']
  #allocation1 [shape = 'u32[144,128]{1,0:T(1,128)}', space=vmem, size = 0x12000, scoped, tag = 'internal scratch']
  %s0 = inlined_call_operand.vmem [shape: f32[8,256], index: 0, kind: input, shape index: {}]
  %s1 = inlined_call_operand.vmem [shape: f32[8,256], index: 1, kind: input, shape index: {}]
  %s2 = inlined_call_operand.vmem [shape: f32[8,256], index: 2, kind: output, shape index: {0}]
  %s3 = inlined_call_operand.vmem [shape: f32[8,256], index: 3, kind: output, shape index: {1}]
  %4 = xla_tuple %s2, %s3
  %s5 = sld [smem:[#allocation0]]
  $region26: #{csfnet_forward.1} parent=0
    _
  %s7 = ssub.s32 1, %s5
  %s8 = scalar_select 0, %s7, %s5
  // Predicated region
  $region2: #{csfnet_forward.1} parent=0 // pred_check
    _
  $region3: #{csfnet_forward.1} parent=0 // pred_check_branch
    %10 = sbr.rel (0) target = $region5
  $region4: #{csfnet_forward.1} parent=0 // pred_region
    _
  $region5: #{csfnet_forward.1} parent=0 // pred_fallthru
    _
  // Predicated region
  $region6: #{csfnet_forward.1} parent=0 // pred_check
    _
  $region7: #{csfnet_forward.1} parent=0 // pred_check_branch
    %12 = sbr.rel (0) target = $region9
  $region8: #{csfnet_forward.1} parent=0 // pred_region
    _
  $region9: #{csfnet_forward.1} parent=0 // pred_fallthru
    _
  %v13 = vld [vmem:[%s0] sm:$0xff]
  %v14 = vld [vmem:[%s0 + $0x8] sm:$0xff]
  %v15 = vld [vmem:[%s1] sm:$0xff]
  %v16 = vld [vmem:[%s1 + $0x8] sm:$0xff]
  %v17 = vmul.f32 %v13, %v15
  %v18 = vmul.f32 %v14, %v16
  %v19 = vadd.f32 %v17, %v18
  %20 = vadd.xlane.f32.xlu0 %v19
  %v21 = vpop.xlane.xlu0 %20
  %v22 = vmul.f32 %v13, %v13
  %v23 = vmul.f32 %v14, %v14
  %v24 = vadd.f32 %v22, %v23
  %25 = vadd.xlane.f32.xlu0 %v24
  %v26 = vpop.xlane.xlu0 %25
  %v27 = vrsqrt.pop %v26
  %v28 = vmul.f32 %v26, %v27
  %vm29 = vcmp.eq.f32.partialorder %v26, inf
  %v30 = vsel %vm29, %v26, %v28
  %vm31 = vcmp.eq.f32.partialorder %v26, 0.0
  %v32 = vand.u32 %v26, 2147483648
  %v33 = vsel %vm31, %v32, %v30
  %v34 = vmul.f32 %v15, %v15
  %v35 = vmul.f32 %v16, %v16
  %v36 = vadd.f32 %v34, %v35
  %37 = vadd.xlane.f32.xlu0 %v36
  %v38 = vpop.xlane.xlu0 %37
  %v39 = vrsqrt.pop %v38
  %v40 = vmul.f32 %v38, %v39
  %vm41 = vcmp.eq.f32.partialorder %v38, inf
  %v42 = vsel %vm41, %v38, %v40
  %vm43 = vcmp.eq.f32.partialorder %v38, 0.0
  %v44 = vand.u32 %v38, 2147483648
  %v45 = vsel %vm43, %v44, %v42
  %v46 = vmul.f32 %v33, %v45
  %v47 = vmax.f32 %v46, 1e-08
  %v48 = vrcp.pop %v47
  %v49 = vmul.f32 %v21, %v48
  %v50 = vmax.f32 %v49, 0.0
  %v51 = vadd.f32 %v50, 1.0
  %v52 = vmul.f32 %v51, %v13
  %v53 = vmul.f32 %v51, %v14
  %54 = vst [vmem:[%s2] sm:$0xff] %v52
  %55 = vst [vmem:[%s2 + $0x8] sm:$0xff] %v53
  %v56 = vsub.f32 2.0, %v50
  %v57 = vmul.f32 %v56, %v15
  %v58 = vmul.f32 %v56, %v16
  %59 = vst [vmem:[%s3] sm:$0xff] %v57
  %60 = vst [vmem:[%s3 + $0x8] sm:$0xff] %v58
  // Predicated region
  $region10: #{csfnet_forward.1} parent=0 // pred_check
    _
  $region11: #{csfnet_forward.1} parent=0 // pred_check_branch
    %62 = sbr.rel (0) target = $region13
  $region12: #{csfnet_forward.1} parent=0 // pred_region
    _
  $region13: #{csfnet_forward.1} parent=0 // pred_fallthru
    _
  // Predicated region
  $region14: #{csfnet_forward.1} parent=0 // pred_check
    _
  $region15: #{csfnet_forward.1} parent=0 // pred_check_branch
    %64 = sbr.rel (0) target = $region17
  $region16: #{csfnet_forward.1} parent=0 // pred_region
    _
  $region17: #{csfnet_forward.1} parent=0 // pred_fallthru
    _
  // Predicated region
  $region18: #{csfnet_forward.1} parent=0 // pred_check
    _
  $region19: #{csfnet_forward.1} parent=0 // pred_check_branch
    %66 = sbr.rel (0) target = $region21
  $region20: #{csfnet_forward.1} parent=0 // pred_region
    _
  $region21: #{csfnet_forward.1} parent=0 // pred_fallthru
    _
  // Predicated region
  $region22: #{csfnet_forward.1} parent=0 // pred_check
    _
  $region23: #{csfnet_forward.1} parent=0 // pred_check_branch
    %68 = sbr.rel (0) target = $region25
  $region24: #{csfnet_forward.1} parent=0 // pred_region
    _
  $region25: #{csfnet_forward.1} parent=0 // pred_fallthru
    _

</llo_original>
